<compile_context>
chip_gen: v7x
topology: tpu7x:2x2x1
jax: 0.10.0
libtpu: 0.0.40
codegen_flags: <defaults>
</compile_context>

<pallas_src>
import jax
import jax.numpy as jnp
from jax.experimental import pallas as pl
from jax.experimental.pallas import tpu as pltpu

# ---- static problem sizes (match nn.Module defaults) -----------------------
B = 2             # batch
L = 6             # num_features (Conv1d sequence length)
C1, C2 = 32, 64   # conv channel counts
L1 = L + 1        # conv1 out length (k=2, pad=1)   -> 7
LP = L1 - 1       # maxpool(k=2, s=1) out length    -> 6
L2 = LP + 1       # conv2 out length (k=2, pad=1)   -> 7
FLAT = C2 * L2    # flatten size                    -> 448
H1, H2, NCLS = 256, 128, 26
NOUT = 128        # lane-padded logits width (lane-dense store)
W1OFF = 256       # 128-lane-aligned offset of the 2nd conv1 copy
W1COLS = W1OFF + LP * C1   # 448: packed conv1 output width
EPS = 1e-5        # BatchNorm eps
MAX_TB = 1024     # batch-tile cap (VMEM budget + per-step overhead amortized)


def cnn_kernel(x_ref, w1_ref, w2_ref, wfc1_ref, wfc2_ref, wfc3_ref, b_ref,
               out_ref):
    f32 = jnp.float32
    bf16 = jnp.bfloat16
    x = x_ref[...].astype(bf16)                                   # (TB, 8)

    # conv1 (+ folded BN1): W1 emits TWO copies of the conv1 output time
    # blocks -- lanes [0:192] hold t=0..5, lanes [256:448] hold t=1..6 -- so
    # the maxpool below is an elementwise max of two 128-lane-aligned slabs.
    y1 = jnp.dot(x, w1_ref[...], preferred_element_type=f32)      # (TB, 448)

    # maxpool1d(k=2, s=1): p1[t] = max(conv1[t], conv1[t+1]).  The per-channel
    # bias (folded BN) is identical for both copies, so it commutes with the
    # max; relu(max(a, b) + bias) == max(relu(a + bias), relu(b + bias)).
    p1 = jnp.maximum(
        jnp.maximum(y1[:, :LP * C1], y1[:, W1OFF:W1OFF + LP * C1])
        + b_ref[0:1, :LP * C1], 0.0).astype(bf16)                  # (TB, 192)

    # conv2 (pad=1, + folded BN2) as ONE block-structured matmul producing the
    # lane-flattened (t*64 + c) layout directly (no reshape, no per-tap dots).
    y2 = jnp.dot(p1, w2_ref[...], preferred_element_type=f32)     # (TB, 448)
    y2 = jnp.maximum(y2 + b_ref[1:2, :L2 * C2], 0.0).astype(bf16)

    # fc1: torch's channel-major flatten order is absorbed into the weight
    # permutation done in the wrapper, so this is a single K=448 matmul.
    h = jnp.dot(y2, wfc1_ref[...], preferred_element_type=f32)    # (TB, 256)
    h = jnp.maximum(h + b_ref[2:3, :H1], 0.0).astype(bf16)

    # dropout(p=0.4) -> identity (inference mode)
    h = jnp.dot(h, wfc2_ref[...], preferred_element_type=f32)     # (TB, 128)
    h = jnp.maximum(h + b_ref[3:4, :H2], 0.0).astype(bf16)

    # dropout -> identity; fc3 padded to 128 output lanes for a lane-dense store
    out_ref[...] = (jnp.dot(h, wfc3_ref[...], preferred_element_type=f32)
                    + b_ref[4:5, :NOUT])


def cnn_pallas(x_pad, params):
    """x_pad: (B, L+2) zero-padded single-channel inputs; params: packed weights."""
    Bn = x_pad.shape[0]
    # Batch tiling: whole batch in one tile up to MAX_TB rows; 1024-row tiles
    # beyond that (>= 2 grid steps -> megacore sharding on v7x).
    if Bn <= MAX_TB:
        tb, Bp = Bn, Bn
    else:
        tb = MAX_TB
        Bp = pl.cdiv(Bn, tb) * tb
        x_pad = jnp.pad(x_pad, ((0, Bp - Bn), (0, 0)))
    grid = (Bp // tb,)

    def wspec(a):
        # grid-invariant block: Pallas skips re-DMA when the block index
        # does not change across grid steps.
        return pl.BlockSpec(a.shape, lambda b: (0, 0))

    # Advisory cost hint (the B=2 serving case is pure launch/DMA latency;
    # this lets XLA overlap the call with surrounding work).
    mm_macs = (8 * W1COLS + (LP * C1) * (L2 * C2) + FLAT * H1
               + H1 * H2 + H2 * NOUT)
    weight_bytes = sum(int(a.size) * a.dtype.itemsize for a in params)
    cost = pl.CostEstimate(
        flops=2 * Bp * mm_macs,
        transcendentals=0,
        bytes_accessed=weight_bytes + Bp * (L + 2) * 4 + Bp * NOUT * 4)

    out = pl.pallas_call(
        cnn_kernel,
        out_shape=jax.ShapeDtypeStruct((Bp, NOUT), jnp.float32),
        grid_spec=pltpu.PrefetchScalarGridSpec(
            num_scalar_prefetch=0,
            grid=grid,
            in_specs=[pl.BlockSpec((tb, L + 2), lambda b: (b, 0))]
                     + [wspec(a) for a in params],
            out_specs=pl.BlockSpec((tb, NOUT), lambda b: (b, 0)),
        ),
        compiler_params=pltpu.CompilerParams(
            dimension_semantics=("parallel",)),   # batch tiles are independent
        cost_estimate=cost,
    )(x_pad, *params)
    return out[:Bn, :NCLS]                                          # (B, 26)


def pack_params(conv1_w, conv1_b, bn1, conv2_w, conv2_b, bn2,
                fc1_w, fc1_b, fc2_w, fc2_b, fc3_w, fc3_b):
    """Fold BN, build block-structured bf16 conv matrices, pack f32 biases."""
    bf16 = jnp.bfloat16
    bn1_g, bn1_be, bn1_m, bn1_v = bn1
    bn2_g, bn2_be, bn2_m, bn2_v = bn2
    s1 = bn1_g / jnp.sqrt(bn1_v + EPS)
    t1 = bn1_be - bn1_m * s1
    s2 = bn2_g / jnp.sqrt(bn2_v + EPS)
    t2 = bn2_be - bn2_m * s2

    # conv1 -> (8, 448) block-structured matrix with BN1 folded in.  Two
    # copies of the output time blocks: t=0..5 at cols [0:192], t=1..6 at the
    # 128-lane-aligned offset 256 (makes the maxpool a lane-aligned max).
    w1f = conv1_w[:, 0, :] * s1[:, None]                     # (32, 2)
    W1 = jnp.zeros((L + 2, W1COLS), jnp.float32)
    for t in range(LP):                                      # copy A: conv1[t]
        W1 = W1.at[t,     t * C1:(t + 1) * C1].set(w1f[:, 0])
        W1 = W1.at[t + 1, t * C1:(t + 1) * C1].set(w1f[:, 1])
    for t in range(LP):                                      # copy B: conv1[t+1]
        W1 = W1.at[t + 1, W1OFF + t * C1:W1OFF + (t + 1) * C1].set(w1f[:, 0])
        W1 = W1.at[t + 2, W1OFF + t * C1:W1OFF + (t + 1) * C1].set(w1f[:, 1])
    bias1 = jnp.tile(conv1_b * s1 + t1, LP)                  # (192,) post-pool

    # conv2 -> (192, 448) block-structured matrix (conv padding=1 built in)
    w2f0 = (conv2_w[:, :, 0] * s2[:, None]).T                # (32, 64)
    w2f1 = (conv2_w[:, :, 1] * s2[:, None]).T                # (32, 64)
    W2 = jnp.zeros((LP * C1, L2 * C2), jnp.float32)
    for t in range(L2):
        if 0 <= t - 1 < LP:
            W2 = W2.at[(t - 1) * C1:t * C1, t * C2:(t + 1) * C2].set(w2f0)
        if t < LP:
            W2 = W2.at[t * C1:(t + 1) * C1, t * C2:(t + 1) * C2].set(w2f1)
    bias2 = jnp.tile(conv2_b * s2 + t2, L2)                  # (448,)

    # fc1: kernel flat index = t*64 + c ; torch flatten index = c*7 + t
    Wfc1 = fc1_w.T.reshape(C2, L2, H1).transpose(1, 0, 2).reshape(FLAT, H1)
    Wfc2 = fc2_w.T                                           # (256, 128)
    Wfc3 = jnp.pad(fc3_w.T, ((0, 0), (0, NOUT - NCLS)))       # (128, 128)
    bias3 = jnp.pad(fc3_b, (0, NOUT - NCLS))                  # (128,)

    def row(v):
        return jnp.pad(v, (0, FLAT - v.shape[0]))[None, :]
    biases = jnp.concatenate(
        [row(bias1), row(bias2), row(fc1_b), row(fc2_b), row(bias3)], axis=0)

    # Weights in bf16 (f32 accumulation inside the kernel); biases stay f32.
    return (W1.astype(bf16), W2.astype(bf16), Wfc1.astype(bf16),
            Wfc2.astype(bf16), Wfc3.astype(bf16), biases.astype(jnp.float32))


def reference_forward(x, conv1_w, conv1_b, s1, t1, conv2_w, conv2_b, s2, t2,
                      fc1_w, fc1_b, fc2_w, fc2_b, fc3_w, fc3_b):
    """Pure-JAX f32 reference mirroring the PyTorch forward (NCL layout)."""
    xp = jnp.pad(x, ((0, 0), (0, 0), (1, 1)))
    win1 = jnp.stack([xp[:, :, :-1], xp[:, :, 1:]], axis=-1)      # (B,1,7,2)
    y1 = jnp.einsum('bitk,oik->bot', win1, conv1_w) + conv1_b[None, :, None]
    y1 = jnp.maximum(y1 * s1[None, :, None] + t1[None, :, None], 0.0)
    p1 = jnp.maximum(y1[:, :, :-1], y1[:, :, 1:])                 # (B,32,6)
    pp = jnp.pad(p1, ((0, 0), (0, 0), (1, 1)))
    win2 = jnp.stack([pp[:, :, :-1], pp[:, :, 1:]], axis=-1)      # (B,32,7,2)
    y2 = jnp.einsum('bitk,oik->bot', win2, conv2_w) + conv2_b[None, :, None]
    y2 = jnp.maximum(y2 * s2[None, :, None] + t2[None, :, None], 0.0)
    flat = y2.reshape(y2.shape[0], -1)                            # torch flatten
    h = jnp.maximum(flat @ fc1_w.T + fc1_b, 0.0)
    h = jnp.maximum(h @ fc2_w.T + fc2_b, 0.0)
    return h @ fc3_w.T + fc3_b


def _check(out, ref, name):
    # bf16 weights/activations -> loosened tolerance vs. the f32 reference.
    err = float(jnp.max(jnp.abs(out - ref)))
    scale = float(jnp.max(jnp.abs(ref)))
    assert err <= 0.05 * scale + 0.03, (
        f"{name}: max|diff|={err:.5f} vs max|ref|={scale:.5f}")


if __name__ == "__main__":
    f32 = jnp.float32
    keys = jax.random.split(jax.random.PRNGKey(0), 20)

    # input: (B, input_channels=1, num_features=6), PyTorch NCL
    x = jax.random.normal(keys[0], (B, 1, L), f32)

    # deterministic synthetic parameters (PyTorch-convention shapes)
    conv1_w = 0.4 * jax.random.normal(keys[1], (C1, 1, 2), f32)
    conv1_b = 0.1 * jax.random.normal(keys[2], (C1,), f32)
    bn1_g = 1.0 + 0.1 * jax.random.normal(keys[3], (C1,), f32)
    bn1_b = 0.1 * jax.random.normal(keys[4], (C1,), f32)
    bn1_m = 0.1 * jax.random.normal(keys[5], (C1,), f32)
    bn1_v = 0.5 + jnp.abs(jax.random.normal(keys[6], (C1,), f32))

    conv2_w = 0.2 * jax.random.normal(keys[7], (C2, C1, 2), f32)
    conv2_b = 0.1 * jax.random.normal(keys[8], (C2,), f32)
    bn2_g = 1.0 + 0.1 * jax.random.normal(keys[9], (C2,), f32)
    bn2_b = 0.1 * jax.random.normal(keys[10], (C2,), f32)
    bn2_m = 0.1 * jax.random.normal(keys[11], (C2,), f32)
    bn2_v = 0.5 + jnp.abs(jax.random.normal(keys[12], (C2,), f32))

    fc1_w = 0.05 * jax.random.normal(keys[13], (H1, FLAT), f32)
    fc1_b = 0.1 * jax.random.normal(keys[14], (H1,), f32)
    fc2_w = 0.08 * jax.random.normal(keys[15], (H2, H1), f32)
    fc2_b = 0.1 * jax.random.normal(keys[16], (H2,), f32)
    fc3_w = 0.1 * jax.random.normal(keys[17], (NCLS, H2), f32)
    fc3_b = 0.1 * jax.random.normal(keys[18], (NCLS,), f32)

    # glue: fold BN + pack weights into the kernel's lane-blocked bf16 layout
    kparams = pack_params(conv1_w, conv1_b, (bn1_g, bn1_b, bn1_m, bn1_v),
                          conv2_w, conv2_b, (bn2_g, bn2_b, bn2_m, bn2_v),
                          fc1_w, fc1_b, fc2_w, fc2_b, fc3_w, fc3_b)

    # reference constants (running-stats BN, inference dropout)
    s1 = bn1_g / jnp.sqrt(bn1_v + EPS)
    t1 = bn1_b - bn1_m * s1
    s2 = bn2_g / jnp.sqrt(bn2_v + EPS)
    t2 = bn2_b - bn2_m * s2

    # ---- small-batch (serving) path: B=2, grid=(1,) -------------------------
    xp = jnp.pad(x[:, 0, :], ((0, 0), (1, 1)))                    # (B, 8)
    out = jax.block_until_ready(cnn_pallas(xp, kparams))
    ref = reference_forward(x, conv1_w, conv1_b, s1, t1,
                            conv2_w, conv2_b, s2, t2,
                            fc1_w, fc1_b, fc2_w, fc2_b, fc3_w, fc3_b)
    assert out.shape == (B, NCLS)
    _check(out, ref, "small-batch")

    # ---- large-batch path: 2048 rows -> 1024-row tiles, grid=(2,) -----------
    BL = 2048
    xl = jax.random.normal(keys[19], (BL, 1, L), f32)
    xlp = jnp.pad(xl[:, 0, :], ((0, 0), (1, 1)))                  # (BL, 8)
    out_l = jax.block_until_ready(cnn_pallas(xlp, kparams))
    ref_l = reference_forward(xl, conv1_w, conv1_b, s1, t1,
                              conv2_w, conv2_b, s2, t2,
                              fc1_w, fc1_b, fc2_w, fc2_b, fc3_w, fc3_b)
    assert out_l.shape == (BL, NCLS)
    _check(out_l, ref_l, "large-batch")

    print("KERNEL_OK")
</pallas_src>

<mosaic_0001>
module attributes {stable_mosaic.version = 11 : i64} {
  func.func @cnn_kernel(%arg0: i32, %arg1: memref<2x8xf32, #tpu.memory_space<vmem>>, %arg2: memref<8x448xbf16, #tpu.memory_space<vmem>>, %arg3: memref<192x448xbf16, #tpu.memory_space<vmem>>, %arg4: memref<448x256xbf16, #tpu.memory_space<vmem>>, %arg5: memref<256x128xbf16, #tpu.memory_space<vmem>>, %arg6: memref<128x128xbf16, #tpu.memory_space<vmem>>, %arg7: memref<5x448xf32, #tpu.memory_space<vmem>>, %arg8: memref<2x128xf32, #tpu.memory_space<vmem>>) attributes {dimension_semantics = [#tpu.dimension_semantics<parallel>], iteration_bounds = array<i64: 1>, scalar_prefetch = 0 : i64, scratch_operands = 0 : i64, tpu.core_type = #tpu.core_type<tc>, window_params = [{transform_indices = @transform_0, window_bounds = array<i64: 2, 8>}, {pipeline_mode = #tpu.pipeline_mode<synchronous>, transform_indices = @transform_1, window_bounds = array<i64: 8, 448>}, {pipeline_mode = #tpu.pipeline_mode<synchronous>, transform_indices = @transform_2, window_bounds = array<i64: 192, 448>}, {pipeline_mode = #tpu.pipeline_mode<synchronous>, transform_indices = @transform_3, window_bounds = array<i64: 448, 256>}, {pipeline_mode = #tpu.pipeline_mode<synchronous>, transform_indices = @transform_4, window_bounds = array<i64: 256, 128>}, {pipeline_mode = #tpu.pipeline_mode<synchronous>, transform_indices = @transform_5, window_bounds = array<i64: 128, 128>}, {pipeline_mode = #tpu.pipeline_mode<synchronous>, transform_indices = @transform_6, window_bounds = array<i64: 5, 448>}, {transform_indices = @transform_7, window_bounds = array<i64: 2, 128>}]} {
    %c0 = arith.constant 0 : index
    %c0_0 = arith.constant 0 : index
    %0 = vector.load %arg1[%c0, %c0_0] : memref<2x8xf32, #tpu.memory_space<vmem>>, vector<2x8xf32>
    %1 = arith.truncf %0 : vector<2x8xf32> to vector<2x8xbf16>
    %c0_1 = arith.constant 0 : index
    %c0_2 = arith.constant 0 : index
    %2 = vector.load %arg2[%c0_1, %c0_2] : memref<8x448xbf16, #tpu.memory_space<vmem>>, vector<8x448xbf16>
    %cst = arith.constant dense<0.000000e+00> : vector<2x448xf32>
    %3 = tpu.matmul %1, %2, %cst {dimension_numbers = #tpu.dot_dimension_numbers<[1], [0], [0], [1], [0, 0, 1, 1], [], []>} : vector<2x8xbf16>, vector<8x448xbf16>, vector<2x448xf32> -> vector<2x448xf32>
    %4 = vector.extract_strided_slice %3 {offsets = [0, 0], sizes = [2, 192], strides = [1, 1]} : vector<2x448xf32> to vector<2x192xf32>
    %5 = vector.extract_strided_slice %3 {offsets = [0, 256], sizes = [2, 192], strides = [1, 1]} : vector<2x448xf32> to vector<2x192xf32>
    %6 = arith.maximumf %4, %5 : vector<2x192xf32>
    %c0_3 = arith.constant 0 : index
    %c0_4 = arith.constant 0 : index
    %7 = vector.load %arg7[%c0_3, %c0_4] : memref<5x448xf32, #tpu.memory_space<vmem>>, vector<1x192xf32>
    %8 = vector.broadcast %7 : vector<1x192xf32> to vector<2x192xf32>
    %9 = arith.addf %6, %8 : vector<2x192xf32>
    %cst_5 = arith.constant 0.000000e+00 : f32
    %10 = vector.broadcast %cst_5 : f32 to vector<2x192xf32>
    %11 = arith.maximumf %9, %10 : vector<2x192xf32>
    %12 = arith.truncf %11 : vector<2x192xf32> to vector<2x192xbf16>
    %c0_6 = arith.constant 0 : index
    %c0_7 = arith.constant 0 : index
    %13 = vector.load %arg3[%c0_6, %c0_7] : memref<192x448xbf16, #tpu.memory_space<vmem>>, vector<192x448xbf16>
    %cst_8 = arith.constant dense<0.000000e+00> : vector<2x448xf32>
    %14 = tpu.matmul %12, %13, %cst_8 {dimension_numbers = #tpu.dot_dimension_numbers<[1], [0], [0], [1], [0, 0, 1, 1], [], []>} : vector<2x192xbf16>, vector<192x448xbf16>, vector<2x448xf32> -> vector<2x448xf32>
    %c1 = arith.constant 1 : index
    %c0_9 = arith.constant 0 : index
    %15 = vector.load %arg7[%c1, %c0_9] : memref<5x448xf32, #tpu.memory_space<vmem>>, vector<1x448xf32>
    %16 = vector.broadcast %15 : vector<1x448xf32> to vector<2x448xf32>
    %17 = arith.addf %14, %16 : vector<2x448xf32>
    %cst_10 = arith.constant 0.000000e+00 : f32
    %18 = vector.broadcast %cst_10 : f32 to vector<2x448xf32>
    %19 = arith.maximumf %17, %18 : vector<2x448xf32>
    %20 = arith.truncf %19 : vector<2x448xf32> to vector<2x448xbf16>
    %c0_11 = arith.constant 0 : index
    %c0_12 = arith.constant 0 : index
    %21 = vector.load %arg4[%c0_11, %c0_12] : memref<448x256xbf16, #tpu.memory_space<vmem>>, vector<448x256xbf16>
    %cst_13 = arith.constant dense<0.000000e+00> : vector<2x256xf32>
    %22 = tpu.matmul %20, %21, %cst_13 {dimension_numbers = #tpu.dot_dimension_numbers<[1], [0], [0], [1], [0, 0, 1, 1], [], []>} : vector<2x448xbf16>, vector<448x256xbf16>, vector<2x256xf32> -> vector<2x256xf32>
    %c2 = arith.constant 2 : index
    %c0_14 = arith.constant 0 : index
    %23 = vector.load %arg7[%c2, %c0_14] : memref<5x448xf32, #tpu.memory_space<vmem>>, vector<1x256xf32>
    %24 = vector.broadcast %23 : vector<1x256xf32> to vector<2x256xf32>
    %25 = arith.addf %22, %24 : vector<2x256xf32>
    %cst_15 = arith.constant 0.000000e+00 : f32
    %26 = vector.broadcast %cst_15 : f32 to vector<2x256xf32>
    %27 = arith.maximumf %25, %26 : vector<2x256xf32>
    %28 = arith.truncf %27 : vector<2x256xf32> to vector<2x256xbf16>
    %c0_16 = arith.constant 0 : index
    %c0_17 = arith.constant 0 : index
    %29 = vector.load %arg5[%c0_16, %c0_17] : memref<256x128xbf16, #tpu.memory_space<vmem>>, vector<256x128xbf16>
    %cst_18 = arith.constant dense<0.000000e+00> : vector<2x128xf32>
    %30 = tpu.matmul %28, %29, %cst_18 {dimension_numbers = #tpu.dot_dimension_numbers<[1], [0], [0], [1], [0, 0, 1, 1], [], []>} : vector<2x256xbf16>, vector<256x128xbf16>, vector<2x128xf32> -> vector<2x128xf32>
    %c3 = arith.constant 3 : index
    %c0_19 = arith.constant 0 : index
    %31 = vector.load %arg7[%c3, %c0_19] : memref<5x448xf32, #tpu.memory_space<vmem>>, vector<1x128xf32>
    %32 = vector.broadcast %31 : vector<1x128xf32> to vector<2x128xf32>
    %33 = arith.addf %30, %32 : vector<2x128xf32>
    %cst_20 = arith.constant 0.000000e+00 : f32
    %34 = vector.broadcast %cst_20 : f32 to vector<2x128xf32>
    %35 = arith.maximumf %33, %34 : vector<2x128xf32>
    %36 = arith.truncf %35 : vector<2x128xf32> to vector<2x128xbf16>
    %c0_21 = arith.constant 0 : index
    %c0_22 = arith.constant 0 : index
    %37 = vector.load %arg6[%c0_21, %c0_22] : memref<128x128xbf16, #tpu.memory_space<vmem>>, vector<128x128xbf16>
    %cst_23 = arith.constant dense<0.000000e+00> : vector<2x128xf32>
    %38 = tpu.matmul %36, %37, %cst_23 {dimension_numbers = #tpu.dot_dimension_numbers<[1], [0], [0], [1], [0, 0, 1, 1], [], []>} : vector<2x128xbf16>, vector<128x128xbf16>, vector<2x128xf32> -> vector<2x128xf32>
    %c4 = arith.constant 4 : index
    %c0_24 = arith.constant 0 : index
    %39 = vector.load %arg7[%c4, %c0_24] : memref<5x448xf32, #tpu.memory_space<vmem>>, vector<1x128xf32>
    %40 = vector.broadcast %39 : vector<1x128xf32> to vector<2x128xf32>
    %41 = arith.addf %38, %40 : vector<2x128xf32>
    %c0_25 = arith.constant 0 : index
    %c0_26 = arith.constant 0 : index
    %42 = vector.load %arg8[%c0_25, %c0_26] : memref<2x128xf32, #tpu.memory_space<vmem>>, vector<2x128xf32>
    tpu.vector_store %arg8[%c0_25, %c0_26], %41 {strides = array<i32>} : memref<2x128xf32, #tpu.memory_space<vmem>>, vector<2x128xf32>,
    return
  }
  func.func @transform_0(%arg0: i32) -> (i32, i32) {
    %c0_i32 = arith.constant 0 : i32
    %c0_i32_0 = arith.constant 0 : i32
    return %arg0, %c0_i32 : i32, i32
  }
  func.func @transform_1(%arg0: i32) -> (i32, i32) {
    %c0_i32 = arith.constant 0 : i32
    %c0_i32_0 = arith.constant 0 : i32
    %c0_i32_1 = arith.constant 0 : i32
    return %c0_i32, %c0_i32_0 : i32, i32
  }
  func.func @transform_2(%arg0: i32) -> (i32, i32) {
    %c0_i32 = arith.constant 0 : i32
    %c0_i32_0 = arith.constant 0 : i32
    %c0_i32_1 = arith.constant 0 : i32
    return %c0_i32, %c0_i32_0 : i32, i32
  }
  func.func @transform_3(%arg0: i32) -> (i32, i32) {
    %c0_i32 = arith.constant 0 : i32
    %c0_i32_0 = arith.constant 0 : i32
    %c0_i32_1 = arith.constant 0 : i32
    return %c0_i32, %c0_i32_0 : i32, i32
  }
  func.func @transform_4(%arg0: i32) -> (i32, i32) {
    %c0_i32 = arith.constant 0 : i32
    %c0_i32_0 = arith.constant 0 : i32
    %c0_i32_1 = arith.constant 0 : i32
    return %c0_i32, %c0_i32_0 : i32, i32
  }
  func.func @transform_5(%arg0: i32) -> (i32, i32) {
    %c0_i32 = arith.constant 0 : i32
    %c0_i32_0 = arith.constant 0 : i32
    %c0_i32_1 = arith.constant 0 : i32
    return %c0_i32, %c0_i32_0 : i32, i32
  }
  func.func @transform_6(%arg0: i32) -> (i32, i32) {
    %c0_i32 = arith.constant 0 : i32
    %c0_i32_0 = arith.constant 0 : i32
    %c0_i32_1 = arith.constant 0 : i32
    return %c0_i32, %c0_i32_0 : i32, i32
  }
  func.func @transform_7(%arg0: i32) -> (i32, i32) {
    %c0_i32 = arith.constant 0 : i32
    %c0_i32_0 = arith.constant 0 : i32
    return %arg0, %c0_i32 : i32, i32
  }
}

</mosaic_0001>

<llo_original>
// kernel: tpu_custom_call.1
$region0: #{tpu_custom_call.1}
  #allocation0 [shape = 'u32[]', space=smem, size = 0x4, offset = 0x4, fixed_abs, tag = 'smem constant byte address 0x4 - core index']
  #allocation1 [shape = 'u32[144,128]{1,0:T(1,128)}', space=vmem, size = 0x12000, scoped, tag = 'internal scratch']
  %s0 = inlined_call_operand.hbm [shape: f32[2,8], index: 0, kind: input, shape index: {}]
  %s1 = inlined_call_operand.hbm [shape: bf16[8,448], index: 1, kind: input, shape index: {}]
  %s2 = inlined_call_operand.hbm [shape: bf16[192,448], index: 2, kind: input, shape index: {}]
  %s3 = inlined_call_operand.hbm [shape: bf16[448,256], index: 3, kind: input, shape index: {}]
  %s4 = inlined_call_operand.hbm [shape: bf16[256,128], index: 4, kind: input, shape index: {}]
  %s5 = inlined_call_operand.hbm [shape: bf16[128,128], index: 5, kind: input, shape index: {}]
  %s6 = inlined_call_operand.hbm [shape: f32[5,448], index: 6, kind: input, shape index: {}]
  %s7 = inlined_call_operand.hbm [shape: f32[2,128], index: 7, kind: output, shape index: {}]
  %s8 = sld [smem:[#allocation0]]
  $region66: #{tpu_custom_call.1} parent=0
    _
  %s10 = ssub.s32 1, %s8
  %s11 = scalar_select 0, %s10, %s8
  $region1: #{tpu_custom_call.1} parent=0
    #allocation2 [shape = 'u8[1024]{0}', space=vmem, size = 0x400, scoped, tag = 'input window, operand 0, single buffered']
    #allocation3 [shape = 's32[1]{0}', space=sflag, size = 0x4, scoped, tag = 'scoped memory for tpu_custom_call.1']
    #allocation4 [shape = 's32[1]{0}', space=sflag, size = 0x4, scoped, tag = 'scoped memory for tpu_custom_call.1']
    #allocation5 [shape = 'u8[8192]{0}', space=vmem, size = 0x2000, scoped, tag = 'input window, operand 1, single buffered']
    #allocation6 [shape = 's32[1]{0}', space=sflag, size = 0x4, scoped, tag = 'scoped memory for tpu_custom_call.1']
    #allocation7 [shape = 'u8[196608]{0}', space=vmem, size = 0x30000, scoped, tag = 'input window, operand 2, single buffered']
    #allocation8 [shape = 'u8[229376]{0}', space=vmem, size = 0x38000, scoped, tag = 'input window, operand 3, single buffered']
    #allocation9 [shape = 's32[1]{0}', space=sflag, size = 0x4, scoped, tag = 'scoped memory for tpu_custom_call.1']
    #allocation10 [shape = 'u8[65536]{0}', space=vmem, size = 0x10000, scoped, tag = 'input window, operand 4, single buffered']
    #allocation11 [shape = 'u8[32768]{0}', space=vmem, size = 0x8000, scoped, tag = 'input window, operand 5, single buffered']
    #allocation12 [shape = 's32[1]{0}', space=sflag, size = 0x4, scoped, tag = 'scoped memory for tpu_custom_call.1']
    #allocation13 [shape = 'u8[16384]{0}', space=vmem, size = 0x4000, scoped, tag = 'input window, operand 6, single buffered']
    #allocation14 [shape = 'u8[1024]{0}', space=vmem, size = 0x400, scoped, tag = 'output window, operand 0, single buffered']
    %12 = vsyncpa [#allocation3], 0
    %13 = vsyncpa [#allocation6], 0
    %14 = vsyncpa [#allocation9], 0
    %15 = vsyncpa [#allocation12], 0
    %16 = vsyncpa [#allocation4], 0
    // Predicated region
    $region2: #{tpu_custom_call.1} parent=1 // pred_check
      _
    $region3: #{tpu_custom_call.1} parent=1 // pred_check_branch
      %18 = sbr.rel (0) target = $region5
    $region4: #{tpu_custom_call.1} parent=1 // pred_region
      %s20 = ssub.s32 32, 32
      %21 = vsyncadd [#allocation3], %s20
      %s23 = sshll.u32 [#allocation2], 4
      %s24 = int_to_ptr.vmem [resolvable:$true] %s23
      %26 = dma.hbm_to_vmem [thread:$0]  %s0, 32, %s24, [#allocation3]
    $region5: #{tpu_custom_call.1} parent=1 // pred_fallthru
      _
    // Predicated region
    $region6: #{tpu_custom_call.1} parent=1 // pred_check
      _
    $region7: #{tpu_custom_call.1} parent=1 // pred_check_branch
      %28 = sbr.rel (0) target = $region9
    $region8: #{tpu_custom_call.1} parent=1 // pred_region
      %s30 = ssub.s32 256, 256
      %31 = vsyncadd [#allocation6], %s30
      %s33 = sshll.u32 [#allocation5], 4
      %s34 = int_to_ptr.vmem [resolvable:$true] %s33
      %36 = dma.hbm_to_vmem [thread:$0]  %s1, 256, %s34, [#allocation6]
    $region9: #{tpu_custom_call.1} parent=1 // pred_fallthru
      _
    // Predicated region
    $region10: #{tpu_custom_call.1} parent=1 // pred_check
      _
    $region11: #{tpu_custom_call.1} parent=1 // pred_check_branch
      %38 = sbr.rel (0) target = $region13
    $region12: #{tpu_custom_call.1} parent=1 // pred_region
      %s40 = ssub.s32 6144, 6144
      %41 = vsyncadd [#allocation6], %s40
      %s42 = sshll.u32 [#allocation7], 4
      %s43 = int_to_ptr.vmem [resolvable:$true] %s42
      %48 = dma.hbm_to_vmem [thread:$0]  %s2, 6144, %s43, [#allocation6], 256, 256, 16
    $region13: #{tpu_custom_call.1} parent=1 // pred_fallthru
      _
    // Predicated region
    $region14: #{tpu_custom_call.1} parent=1 // pred_check
      _
    $region15: #{tpu_custom_call.1} parent=1 // pred_check_branch
      %50 = sbr.rel (0) target = $region17
    $region16: #{tpu_custom_call.1} parent=1 // pred_region
      %s52 = ssub.s32 7168, 7168
      %53 = vsyncadd [#allocation9], %s52
      %s54 = sshll.u32 [#allocation8], 4
      %s55 = int_to_ptr.vmem [resolvable:$true] %s54
      %60 = dma.hbm_to_vmem [thread:$0]  %s3, 7168, %s55, [#allocation9], 128, 128, 8
    $region17: #{tpu_custom_call.1} parent=1 // pred_fallthru
      _
    // Predicated region
    $region18: #{tpu_custom_call.1} parent=1 // pred_check
      _
    $region19: #{tpu_custom_call.1} parent=1 // pred_check_branch
      %62 = sbr.rel (0) target = $region21
    $region20: #{tpu_custom_call.1} parent=1 // pred_region
      %s64 = ssub.s32 2048, 2048
      %65 = vsyncadd [#allocation9], %s64
      %s66 = sshll.u32 [#allocation10], 4
      %s67 = int_to_ptr.vmem [resolvable:$true] %s66
      %72 = dma.hbm_to_vmem [thread:$0]  %s4, 2048, %s67, [#allocation9], 64, 64, 4
    $region21: #{tpu_custom_call.1} parent=1 // pred_fallthru
      _
    // Predicated region
    $region22: #{tpu_custom_call.1} parent=1 // pred_check
      _
    $region23: #{tpu_custom_call.1} parent=1 // pred_check_branch
      %74 = sbr.rel (0) target = $region25
    $region24: #{tpu_custom_call.1} parent=1 // pred_region
      %s76 = ssub.s32 1024, 1024
      %77 = vsyncadd [#allocation12], %s76
      %s78 = sshll.u32 [#allocation11], 4
      %s79 = int_to_ptr.vmem [resolvable:$true] %s78
      %84 = dma.hbm_to_vmem [thread:$0]  %s5, 1024, %s79, [#allocation12], 64, 64, 4
    $region25: #{tpu_custom_call.1} parent=1 // pred_fallthru
      _
    // Predicated region
    $region26: #{tpu_custom_call.1} parent=1 // pred_check
      _
    $region27: #{tpu_custom_call.1} parent=1 // pred_check_branch
      %86 = sbr.rel (0) target = $region29
    $region28: #{tpu_custom_call.1} parent=1 // pred_region
      %s88 = ssub.s32 512, 512
      %89 = vsyncadd [#allocation12], %s88
      %s91 = sshll.u32 [#allocation13], 4
      %s92 = int_to_ptr.vmem [resolvable:$true] %s91
      %94 = dma.hbm_to_vmem [thread:$0]  %s6, 512, %s92, [#allocation12]
    $region29: #{tpu_custom_call.1} parent=1 // pred_fallthru
      _
    // Predicated region
    $region30: #{tpu_custom_call.1} parent=1 // pred_check
      _
    $region31: #{tpu_custom_call.1} parent=1 // pred_check_branch
      %96 = sbr.rel (0) target = $region33
    $region32: #{tpu_custom_call.1} parent=1 // pred_region
      %97 = dma.done [#allocation3], 32
    $region33: #{tpu_custom_call.1} parent=1 // pred_fallthru
      _
    // Predicated region
    $region34: #{tpu_custom_call.1} parent=1 // pred_check
      _
    $region35: #{tpu_custom_call.1} parent=1 // pred_check_branch
      %99 = sbr.rel (0) target = $region37
    $region36: #{tpu_custom_call.1} parent=1 // pred_region
      %100 = dma.done [#allocation6], 256
    $region37: #{tpu_custom_call.1} parent=1 // pred_fallthru
      _
    // Predicated region
    $region38: #{tpu_custom_call.1} parent=1 // pred_check
      _
    $region39: #{tpu_custom_call.1} parent=1 // pred_check_branch
      %102 = sbr.rel (0) target = $region41
    $region40: #{tpu_custom_call.1} parent=1 // pred_region
      %103 = dma.done [#allocation6], 6144
    $region41: #{tpu_custom_call.1} parent=1 // pred_fallthru
      _
    // Predicated region
    $region42: #{tpu_custom_call.1} parent=1 // pred_check
      _
    $region43: #{tpu_custom_call.1} parent=1 // pred_check_branch
      %105 = sbr.rel (0) target = $region45
    $region44: #{tpu_custom_call.1} parent=1 // pred_region
      %106 = dma.done [#allocation9], 7168
    $region45: #{tpu_custom_call.1} parent=1 // pred_fallthru
      _
    // Predicated region
    $region46: #{tpu_custom_call.1} parent=1 // pred_check
      _
    $region47: #{tpu_custom_call.1} parent=1 // pred_check_branch
      %108 = sbr.rel (0) target = $region49
    $region48: #{tpu_custom_call.1} parent=1 // pred_region
      %109 = dma.done [#allocation9], 2048
    $region49: #{tpu_custom_call.1} parent=1 // pred_fallthru
      _
    // Predicated region
    $region50: #{tpu_custom_call.1} parent=1 // pred_check
      _
    $region51: #{tpu_custom_call.1} parent=1 // pred_check_branch
      %111 = sbr.rel (0) target = $region53
    $region52: #{tpu_custom_call.1} parent=1 // pred_region
      %112 = dma.done [#allocation12], 1024
    $region53: #{tpu_custom_call.1} parent=1 // pred_fallthru
      _
    // Predicated region
    $region54: #{tpu_custom_call.1} parent=1 // pred_check
      _
    $region55: #{tpu_custom_call.1} parent=1 // pred_check_branch
      %114 = sbr.rel (0) target = $region57
    $region56: #{tpu_custom_call.1} parent=1 // pred_region
      %115 = dma.done [#allocation12], 512
    $region57: #{tpu_custom_call.1} parent=1 // pred_fallthru
      _
    %v117 = vld [vmem:[#allocation2] sm:$0x3]
    %v118 = vpack.c.bf16 %v117, %v117
    %v119 = vld [vmem:[#allocation5] sm:$0xff]
    %v120 = vld [vmem:[#allocation5 + $0x8] sm:$0xff]
    %v123 = vunpack.c.l.b16 %v119
    %v124 = vunpack.c.h.b16 %v119
    %v125 = vunpack.c.l.b16 %v120
    %v126 = vunpack.c.h.b16 %v120
    %v127 = vpack.c.b16 %v123, %v123
    %v128 = vpack.c.b16 %v124, %v124
    %v129 = vpack.c.b16 %v125, %v125
    %v130 = vpack.c.b16 %v126, %v126
    %vm131 = vcmask 64512
    %v133 = vsel %vm131, %v118, 0
    %vm135 = vcmask 1043456
    %v137 = vsel %vm135, %v127, 0
    %v140 = vsel %vm135, %v128, 0
    %v143 = vsel %vm135, %v129, 0
    %v146 = vsel %vm135, %v130, 0
    %148 = vmatprep.subr.bf16.mxu0 %v140
    %149 = vmatpush1.bf16.msra.mxu0 %v137
    %150 = vmatprep.subr.bf16.mxu0 0
    %151 = vmatpush1.bf16.msra.mxu0 0
    %152 = vmatprep.subr.bf16.mxu0 0
    %153 = vmatpush1.bf16.msra.mxu0 0
    %154 = vmatprep.subr.bf16.mxu0 0
    %155 = vmatpush1.bf16.msra.mxu0 0
    %156 = vmatprep.subr.bf16.mxu0 0
    %157 = vmatpush1.bf16.msra.mxu0 0
    %158 = vmatprep.subr.bf16.mxu0 0
    %159 = vmatpush1.bf16.msra.mxu0 0
    %160 = vmatprep.subr.bf16.mxu0 0
    %161 = vmatpush1.bf16.msra.mxu0 0
    %162 = vmatprep.subr.bf16.mxu0 0
    %163 = vmatpush1.bf16.msra.mxu0 0
    %164 = vmatprep.subr.bf16.mxu0 0
    %165 = vmatpush1.bf16.msra.mxu0 0
    %166 = vmatprep.subr.bf16.mxu0 0
    %167 = vmatpush1.bf16.msra.mxu0 0
    %168 = vmatprep.subr.bf16.mxu0 0
    %169 = vmatpush1.bf16.msra.mxu0 0
    %170 = vmatprep.subr.bf16.mxu0 0
    %171 = vmatpush1.bf16.msra.mxu0 0
    %172 = vmatprep.subr.bf16.mxu0 0
    %173 = vmatpush1.bf16.msra.mxu0 0
    %174 = vmatprep.subr.bf16.mxu0 0
    %175 = vmatpush1.bf16.msra.mxu0 0
    %176 = vmatprep.subr.bf16.mxu0 0
    %177 = vmatpush1.bf16.msra.mxu0 0
    %178 = vmatprep.subr.bf16.mxu0 0
    %179 = vmatpush1.bf16.msra.mxu0 0
    %180 = vmatprep.mubr.bf16.mxu0 0
    %181 = vmatmul.mubr.bf16.gmra.mrb[0].mxu0 %v133
    %v182 = vpop.f32.mrb[0].mxu0
    %v183 = vadd.f32 0.0, %v182
    %v184 = vpop.f32.mrb[0].mxu0
    %v185 = vadd.f32 0.0, %v184
    %v186 = vpop.f32.mrb[0].mxu0
    %v187 = vpop.f32.mrb[0].mxu0
    %188 = vdwg.mxu0
    %189 = vmatprep.subr.bf16.mxu0 %v146
    %190 = vmatpush1.bf16.msra.mxu0 %v143
    %191 = vmatprep.subr.bf16.mxu0 0
    %192 = vmatpush1.bf16.msra.mxu0 0
    %193 = vmatprep.subr.bf16.mxu0 0
    %194 = vmatpush1.bf16.msra.mxu0 0
    %195 = vmatprep.subr.bf16.mxu0 0
    %196 = vmatpush1.bf16.msra.mxu0 0
    %197 = vmatprep.subr.bf16.mxu0 0
    %198 = vmatpush1.bf16.msra.mxu0 0
    %199 = vmatprep.subr.bf16.mxu0 0
    %200 = vmatpush1.bf16.msra.mxu0 0
    %201 = vmatprep.subr.bf16.mxu0 0
    %202 = vmatpush1.bf16.msra.mxu0 0
    %203 = vmatprep.subr.bf16.mxu0 0
    %204 = vmatpush1.bf16.msra.mxu0 0
    %205 = vmatprep.subr.bf16.mxu0 0
    %206 = vmatpush1.bf16.msra.mxu0 0
    %207 = vmatprep.subr.bf16.mxu0 0
    %208 = vmatpush1.bf16.msra.mxu0 0
    %209 = vmatprep.subr.bf16.mxu0 0
    %210 = vmatpush1.bf16.msra.mxu0 0
    %211 = vmatprep.subr.bf16.mxu0 0
    %212 = vmatpush1.bf16.msra.mxu0 0
    %213 = vmatprep.subr.bf16.mxu0 0
    %214 = vmatpush1.bf16.msra.mxu0 0
    %215 = vmatprep.subr.bf16.mxu0 0
    %216 = vmatpush1.bf16.msra.mxu0 0
    %217 = vmatprep.subr.bf16.mxu0 0
    %218 = vmatpush1.bf16.msra.mxu0 0
    %219 = vmatprep.subr.bf16.mxu0 0
    %220 = vmatpush1.bf16.msra.mxu0 0
    %221 = vmatprep.mubr.bf16.mxu0 0
    %222 = vmatmul.mubr.bf16.gmra.mrb[0].mxu0 %v133
    %v223 = vpop.f32.mrb[0].mxu0
    %v224 = vadd.f32 0.0, %v223
    %v225 = vpop.f32.mrb[0].mxu0
    %v226 = vadd.f32 0.0, %v225
    %v227 = vpop.f32.mrb[0].mxu0
    %v228 = vpop.f32.mrb[0].mxu0
    %229 = vdwg.mxu0
    %v230 = vmax.f32 %v183, %v224
    %v231 = vmax.f32 %v185, %v226
    %v232 = vld [vmem:[#allocation13] ss:$8 sm:$0x3]
    %v234 = vlaneseq
    %v235 = vshrl.u32 %v234, 7
    %v236 = vsub.s32 0, %v235
    %v237 = vrot.slane %v232, %v236
    %v238 = vlaneseq
    %v239 = vshrl.u32 %v238, 7
    %v240 = vsub.s32 1, %v239
    %v241 = vrot.slane %v232, %v240
    %v244 = vadd.f32 %v230, %v237
    %v245 = vadd.f32 %v231, %v241
    %v246 = vmax.f32 %v244, 0.0
    %v247 = vmax.f32 %v245, 0.0
    %v248 = vpack.c.bf16 %v246, %v246
    %v249 = vpack.c.bf16 %v247, %v247
    %v250 = vld [vmem:[#allocation7] sm:$0xff]
    %v251 = vld [vmem:[#allocation7 + $0x8] sm:$0xff]
    %v252 = vld [vmem:[#allocation7 + $0x10] sm:$0xff]
    %v253 = vld [vmem:[#allocation7 + $0x18] sm:$0xff]
    %v254 = vld [vmem:[#allocation7 + $0x20] sm:$0xff]
    %v255 = vld [vmem:[#allocation7 + $0x28] sm:$0xff]
    %v256 = vld [vmem:[#allocation7 + $0x30] sm:$0xff]
    %v257 = vld [vmem:[#allocation7 + $0x38] sm:$0xff]
    %v258 = vld [vmem:[#allocation7 + $0x40] sm:$0xff]
    %v259 = vld [vmem:[#allocation7 + $0x48] sm:$0xff]
    %v260 = vld [vmem:[#allocation7 + $0x50] sm:$0xff]
    %v261 = vld [vmem:[#allocation7 + $0x58] sm:$0xff]
    %v262 = vld [vmem:[#allocation7 + $0x60] sm:$0xff]
    %v263 = vld [vmem:[#allocation7 + $0x68] sm:$0xff]
    %v264 = vld [vmem:[#allocation7 + $0x70] sm:$0xff]
    %v265 = vld [vmem:[#allocation7 + $0x78] sm:$0xff]
    %v266 = vld [vmem:[#allocation7 + $0x80] sm:$0xff]
    %v267 = vld [vmem:[#allocation7 + $0x88] sm:$0xff]
    %v268 = vld [vmem:[#allocation7 + $0x90] sm:$0xff]
    %v269 = vld [vmem:[#allocation7 + $0x98] sm:$0xff]
    %v270 = vld [vmem:[#allocation7 + $0xa0] sm:$0xff]
    %v271 = vld [vmem:[#allocation7 + $0xa8] sm:$0xff]
    %v272 = vld [vmem:[#allocation7 + $0xb0] sm:$0xff]
    %v273 = vld [vmem:[#allocation7 + $0xb8] sm:$0xff]
    %v274 = vld [vmem:[#allocation7 + $0xc0] sm:$0xff]
    %v275 = vld [vmem:[#allocation7 + $0xc8] sm:$0xff]
    %v276 = vld [vmem:[#allocation7 + $0xd0] sm:$0xff]
    %v277 = vld [vmem:[#allocation7 + $0xd8] sm:$0xff]
    %v278 = vld [vmem:[#allocation7 + $0xe0] sm:$0xff]
    %v279 = vld [vmem:[#allocation7 + $0xe8] sm:$0xff]
    %v280 = vld [vmem:[#allocation7 + $0xf0] sm:$0xff]
    %v281 = vld [vmem:[#allocation7 + $0xf8] sm:$0xff]
    %v282 = vld [vmem:[#allocation7 + $0x100] sm:$0xff]
    %v283 = vld [vmem:[#allocation7 + $0x108] sm:$0xff]
    %v284 = vld [vmem:[#allocation7 + $0x110] sm:$0xff]
    %v285 = vld [vmem:[#allocation7 + $0x118] sm:$0xff]
    %v286 = vld [vmem:[#allocation7 + $0x120] sm:$0xff]
    %v287 = vld [vmem:[#allocation7 + $0x128] sm:$0xff]
    %v288 = vld [vmem:[#allocation7 + $0x130] sm:$0xff]
    %v289 = vld [vmem:[#allocation7 + $0x138] sm:$0xff]
    %v290 = vld [vmem:[#allocation7 + $0x140] sm:$0xff]
    %v291 = vld [vmem:[#allocation7 + $0x148] sm:$0xff]
    %v292 = vld [vmem:[#allocation7 + $0x150] sm:$0xff]
    %v293 = vld [vmem:[#allocation7 + $0x158] sm:$0xff]
    %v294 = vld [vmem:[#allocation7 + $0x160] sm:$0xff]
    %v295 = vld [vmem:[#allocation7 + $0x168] sm:$0xff]
    %v296 = vld [vmem:[#allocation7 + $0x170] sm:$0xff]
    %v297 = vld [vmem:[#allocation7 + $0x178] sm:$0xff]
    %s298 = scalar_lea.vmem [#allocation13], 1
    %v299 = vld [vmem:[%s298] ss:$8 sm:$0xf]
    %v301 = vlaneseq
    %v302 = vshrl.u32 %v301, 7
    %v303 = vsub.s32 0, %v302
    %v304 = vrot.slane %v299, %v303
    %v305 = vlaneseq
    %v306 = vshrl.u32 %v305, 7
    %v307 = vsub.s32 1, %v306
    %v308 = vrot.slane %v299, %v307
    %v309 = vlaneseq
    %v310 = vshrl.u32 %v309, 7
    %v311 = vsub.s32 2, %v310
    %v312 = vrot.slane %v299, %v311
    %v313 = vlaneseq
    %v314 = vshrl.u32 %v313, 7
    %v315 = vsub.s32 3, %v314
    %v316 = vrot.slane %v299, %v315
    %v369 = vunpack.c.l.b16 %v250
    %v370 = vunpack.c.h.b16 %v250
    %v371 = vunpack.c.l.b16 %v251
    %v372 = vunpack.c.h.b16 %v251
    %v373 = vunpack.c.l.b16 %v252
    %v374 = vunpack.c.h.b16 %v252
    %v375 = vunpack.c.l.b16 %v253
    %v376 = vunpack.c.h.b16 %v253
    %v377 = vunpack.c.l.b16 %v254
    %v378 = vunpack.c.h.b16 %v254
    %v379 = vunpack.c.l.b16 %v255
    %v380 = vunpack.c.h.b16 %v255
    %v381 = vunpack.c.l.b16 %v256
    %v382 = vunpack.c.h.b16 %v256
    %v383 = vunpack.c.l.b16 %v257
    %v384 = vunpack.c.h.b16 %v257
    %v385 = vunpack.c.l.b16 %v258
    %v386 = vunpack.c.h.b16 %v258
    %v387 = vunpack.c.l.b16 %v259
    %v388 = vunpack.c.h.b16 %v259
    %v389 = vunpack.c.l.b16 %v260
    %v390 = vunpack.c.h.b16 %v260
    %v391 = vunpack.c.l.b16 %v261
    %v392 = vunpack.c.h.b16 %v261
    %v393 = vunpack.c.l.b16 %v262
    %v394 = vunpack.c.h.b16 %v262
    %v395 = vunpack.c.l.b16 %v263
    %v396 = vunpack.c.h.b16 %v263
    %v397 = vunpack.c.l.b16 %v264
    %v398 = vunpack.c.h.b16 %v264
    %v399 = vunpack.c.l.b16 %v265
    %v400 = vunpack.c.h.b16 %v265
    %v401 = vunpack.c.l.b16 %v266
    %v402 = vunpack.c.h.b16 %v266
    %v403 = vunpack.c.l.b16 %v267
    %v404 = vunpack.c.h.b16 %v267
    %v405 = vunpack.c.l.b16 %v268
    %v406 = vunpack.c.h.b16 %v268
    %v407 = vunpack.c.l.b16 %v269
    %v408 = vunpack.c.h.b16 %v269
    %v409 = vunpack.c.l.b16 %v270
    %v410 = vunpack.c.h.b16 %v270
    %v411 = vunpack.c.l.b16 %v271
    %v412 = vunpack.c.h.b16 %v271
    %v413 = vunpack.c.l.b16 %v272
    %v414 = vunpack.c.h.b16 %v272
    %v415 = vunpack.c.l.b16 %v273
    %v416 = vunpack.c.h.b16 %v273
    %v417 = vunpack.c.l.b16 %v274
    %v418 = vunpack.c.h.b16 %v274
    %v419 = vunpack.c.l.b16 %v275
    %v420 = vunpack.c.h.b16 %v275
    %v421 = vunpack.c.l.b16 %v276
    %v422 = vunpack.c.h.b16 %v276
    %v423 = vunpack.c.l.b16 %v277
    %v424 = vunpack.c.h.b16 %v277
    %v425 = vunpack.c.l.b16 %v278
    %v426 = vunpack.c.h.b16 %v278
    %v427 = vunpack.c.l.b16 %v279
    %v428 = vunpack.c.h.b16 %v279
    %v429 = vunpack.c.l.b16 %v280
    %v430 = vunpack.c.h.b16 %v280
    %v431 = vunpack.c.l.b16 %v281
    %v432 = vunpack.c.h.b16 %v281
    %v433 = vunpack.c.l.b16 %v282
    %v434 = vunpack.c.h.b16 %v282
    %v435 = vunpack.c.l.b16 %v283
    %v436 = vunpack.c.h.b16 %v283
    %v437 = vunpack.c.l.b16 %v284
    %v438 = vunpack.c.h.b16 %v284
    %v439 = vunpack.c.l.b16 %v285
    %v440 = vunpack.c.h.b16 %v285
    %v441 = vunpack.c.l.b16 %v286
    %v442 = vunpack.c.h.b16 %v286
    %v443 = vunpack.c.l.b16 %v287
    %v444 = vunpack.c.h.b16 %v287
    %v445 = vunpack.c.l.b16 %v288
    %v446 = vunpack.c.h.b16 %v288
    %v447 = vunpack.c.l.b16 %v289
    %v448 = vunpack.c.h.b16 %v289
    %v449 = vunpack.c.l.b16 %v290
    %v450 = vunpack.c.h.b16 %v290
    %v451 = vunpack.c.l.b16 %v291
    %v452 = vunpack.c.h.b16 %v291
    %v453 = vunpack.c.l.b16 %v292
    %v454 = vunpack.c.h.b16 %v292
    %v455 = vunpack.c.l.b16 %v293
    %v456 = vunpack.c.h.b16 %v293
    %v457 = vunpack.c.l.b16 %v294
    %v458 = vunpack.c.h.b16 %v294
    %v459 = vunpack.c.l.b16 %v295
    %v460 = vunpack.c.h.b16 %v295
    %v461 = vunpack.c.l.b16 %v296
    %v462 = vunpack.c.h.b16 %v296
    %v463 = vunpack.c.l.b16 %v297
    %v464 = vunpack.c.h.b16 %v297
    %v465 = vpack.c.b16 %v373, %v369
    %v466 = vpack.c.b16 %v374, %v370
    %v467 = vpack.c.b16 %v375, %v371
    %v468 = vpack.c.b16 %v376, %v372
    %v469 = vpack.c.b16 %v381, %v377
    %v470 = vpack.c.b16 %v382, %v378
    %v471 = vpack.c.b16 %v383, %v379
    %v472 = vpack.c.b16 %v384, %v380
    %v473 = vpack.c.b16 %v389, %v385
    %v474 = vpack.c.b16 %v390, %v386
    %v475 = vpack.c.b16 %v391, %v387
    %v476 = vpack.c.b16 %v392, %v388
    %v477 = vpack.c.b16 %v397, %v393
    %v478 = vpack.c.b16 %v398, %v394
    %v479 = vpack.c.b16 %v399, %v395
    %v480 = vpack.c.b16 %v400, %v396
    %v481 = vpack.c.b16 %v405, %v401
    %v482 = vpack.c.b16 %v406, %v402
    %v483 = vpack.c.b16 %v407, %v403
    %v484 = vpack.c.b16 %v408, %v404
    %v485 = vpack.c.b16 %v413, %v409
    %v486 = vpack.c.b16 %v414, %v410
    %v487 = vpack.c.b16 %v415, %v411
    %v488 = vpack.c.b16 %v416, %v412
    %v489 = vpack.c.b16 %v421, %v417
    %v490 = vpack.c.b16 %v422, %v418
    %v491 = vpack.c.b16 %v423, %v419
    %v492 = vpack.c.b16 %v424, %v420
    %v493 = vpack.c.b16 %v429, %v425
    %v494 = vpack.c.b16 %v430, %v426
    %v495 = vpack.c.b16 %v431, %v427
    %v496 = vpack.c.b16 %v432, %v428
    %v497 = vpack.c.b16 %v437, %v433
    %v498 = vpack.c.b16 %v438, %v434
    %v499 = vpack.c.b16 %v439, %v435
    %v500 = vpack.c.b16 %v440, %v436
    %v501 = vpack.c.b16 %v445, %v441
    %v502 = vpack.c.b16 %v446, %v442
    %v503 = vpack.c.b16 %v447, %v443
    %v504 = vpack.c.b16 %v448, %v444
    %v505 = vpack.c.b16 %v453, %v449
    %v506 = vpack.c.b16 %v454, %v450
    %v507 = vpack.c.b16 %v455, %v451
    %v508 = vpack.c.b16 %v456, %v452
    %v509 = vpack.c.b16 %v461, %v457
    %v510 = vpack.c.b16 %v462, %v458
    %v511 = vpack.c.b16 %v463, %v459
    %v512 = vpack.c.b16 %v464, %v460
    %vm561 = vcmask 523264
    %v563 = vsel %vm561, %v249, 0
    %565 = vmatprep.subr.bf16.mxu0 %v466
    %566 = vmatpush1.bf16.msra.mxu0 %v465
    %567 = vmatprep.subr.bf16.mxu0 %v470
    %568 = vmatpush1.bf16.msra.mxu0 %v469
    %569 = vmatprep.subr.bf16.mxu0 %v474
    %570 = vmatpush1.bf16.msra.mxu0 %v473
    %571 = vmatprep.subr.bf16.mxu0 %v478
    %572 = vmatpush1.bf16.msra.mxu0 %v477
    %573 = vmatprep.subr.bf16.mxu0 %v482
    %574 = vmatpush1.bf16.msra.mxu0 %v481
    %575 = vmatprep.subr.bf16.mxu0 %v486
    %576 = vmatpush1.bf16.msra.mxu0 %v485
    %577 = vmatprep.subr.bf16.mxu0 %v490
    %578 = vmatpush1.bf16.msra.mxu0 %v489
    %579 = vmatprep.subr.bf16.mxu0 %v494
    %580 = vmatpush1.bf16.msra.mxu0 %v493
    %581 = vmatprep.subr.bf16.mxu0 %v498
    %582 = vmatpush1.bf16.msra.mxu0 %v497
    %583 = vmatprep.subr.bf16.mxu0 %v502
    %584 = vmatpush1.bf16.msra.mxu0 %v501
    %585 = vmatprep.subr.bf16.mxu0 %v506
    %586 = vmatpush1.bf16.msra.mxu0 %v505
    %587 = vmatprep.subr.bf16.mxu0 %v510
    %588 = vmatpush1.bf16.msra.mxu0 %v509
    %589 = vmatprep.subr.bf16.mxu0 0
    %590 = vmatpush1.bf16.msra.mxu0 0
    %591 = vmatprep.subr.bf16.mxu0 0
    %592 = vmatpush1.bf16.msra.mxu0 0
    %593 = vmatprep.subr.bf16.mxu0 0
    %594 = vmatpush1.bf16.msra.mxu0 0
    %595 = vmatprep.subr.bf16.mxu0 0
    %596 = vmatpush1.bf16.msra.mxu0 0
    %597 = vmatprep.mubr.bf16.mxu0 %v563
    %598 = vmatmul.mubr.bf16.gmra.mrb[0].mxu0 %v248
    %v599 = vpop.f32.mrb[0].mxu0
    %v600 = vadd.f32 %v304, %v599
    %v601 = vpop.f32.mrb[0].mxu0
    %v602 = vadd.f32 %v308, %v601
    %v603 = vpop.f32.mrb[0].mxu0
    %v604 = vpop.f32.mrb[0].mxu0
    %605 = vdwg.mxu0
    %606 = vmatprep.subr.bf16.mxu0 %v468
    %607 = vmatpush1.bf16.msra.mxu0 %v467
    %608 = vmatprep.subr.bf16.mxu0 %v472
    %609 = vmatpush1.bf16.msra.mxu0 %v471
    %610 = vmatprep.subr.bf16.mxu0 %v476
    %611 = vmatpush1.bf16.msra.mxu0 %v475
    %612 = vmatprep.subr.bf16.mxu0 %v480
    %613 = vmatpush1.bf16.msra.mxu0 %v479
    %614 = vmatprep.subr.bf16.mxu0 %v484
    %615 = vmatpush1.bf16.msra.mxu0 %v483
    %616 = vmatprep.subr.bf16.mxu0 %v488
    %617 = vmatpush1.bf16.msra.mxu0 %v487
    %618 = vmatprep.subr.bf16.mxu0 %v492
    %619 = vmatpush1.bf16.msra.mxu0 %v491
    %620 = vmatprep.subr.bf16.mxu0 %v496
    %621 = vmatpush1.bf16.msra.mxu0 %v495
    %622 = vmatprep.subr.bf16.mxu0 %v500
    %623 = vmatpush1.bf16.msra.mxu0 %v499
    %624 = vmatprep.subr.bf16.mxu0 %v504
    %625 = vmatpush1.bf16.msra.mxu0 %v503
    %626 = vmatprep.subr.bf16.mxu0 %v508
    %627 = vmatpush1.bf16.msra.mxu0 %v507
    %628 = vmatprep.subr.bf16.mxu0 %v512
    %629 = vmatpush1.bf16.msra.mxu0 %v511
    %630 = vmatprep.subr.bf16.mxu0 0
    %631 = vmatpush1.bf16.msra.mxu0 0
    %632 = vmatprep.subr.bf16.mxu0 0
    %633 = vmatpush1.bf16.msra.mxu0 0
    %634 = vmatprep.subr.bf16.mxu0 0
    %635 = vmatpush1.bf16.msra.mxu0 0
    %636 = vmatprep.subr.bf16.mxu0 0
    %637 = vmatpush1.bf16.msra.mxu0 0
    %638 = vmatprep.mubr.bf16.mxu0 %v563
    %639 = vmatmul.mubr.bf16.gmra.mrb[0].mxu0 %v248
    %v640 = vpop.f32.mrb[0].mxu0
    %v641 = vadd.f32 %v312, %v640
    %v642 = vpop.f32.mrb[0].mxu0
    %v643 = vadd.f32 %v316, %v642
    %v644 = vpop.f32.mrb[0].mxu0
    %v645 = vpop.f32.mrb[0].mxu0
    %646 = vdwg.mxu0
    %v647 = vmax.f32 %v600, 0.0
    %v648 = vmax.f32 %v602, 0.0
    %v649 = vmax.f32 %v641, 0.0
    %v650 = vmax.f32 %v643, 0.0
    %v651 = vpack.c.bf16 %v647, %v647
    %v652 = vpack.c.bf16 %v648, %v648
    %v653 = vpack.c.bf16 %v649, %v649
    %v654 = vpack.c.bf16 %v650, %v650
    %v655 = vld [vmem:[#allocation8] sm:$0xff]
    %v656 = vld [vmem:[#allocation8 + $0x8] sm:$0xff]
    %v657 = vld [vmem:[#allocation8 + $0x10] sm:$0xff]
    %v658 = vld [vmem:[#allocation8 + $0x18] sm:$0xff]
    %v659 = vld [vmem:[#allocation8 + $0x20] sm:$0xff]
    %v660 = vld [vmem:[#allocation8 + $0x28] sm:$0xff]
    %v661 = vld [vmem:[#allocation8 + $0x30] sm:$0xff]
    %v662 = vld [vmem:[#allocation8 + $0x38] sm:$0xff]
    %v663 = vld [vmem:[#allocation8 + $0x40] sm:$0xff]
    %v664 = vld [vmem:[#allocation8 + $0x48] sm:$0xff]
    %v665 = vld [vmem:[#allocation8 + $0x50] sm:$0xff]
    %v666 = vld [vmem:[#allocation8 + $0x58] sm:$0xff]
    %v667 = vld [vmem:[#allocation8 + $0x60] sm:$0xff]
    %v668 = vld [vmem:[#allocation8 + $0x68] sm:$0xff]
    %v669 = vld [vmem:[#allocation8 + $0x70] sm:$0xff]
    %v670 = vld [vmem:[#allocation8 + $0x78] sm:$0xff]
    %v671 = vld [vmem:[#allocation8 + $0x80] sm:$0xff]
    %v672 = vld [vmem:[#allocation8 + $0x88] sm:$0xff]
    %v673 = vld [vmem:[#allocation8 + $0x90] sm:$0xff]
    %v674 = vld [vmem:[#allocation8 + $0x98] sm:$0xff]
    %v675 = vld [vmem:[#allocation8 + $0xa0] sm:$0xff]
    %v676 = vld [vmem:[#allocation8 + $0xa8] sm:$0xff]
    %v677 = vld [vmem:[#allocation8 + $0xb0] sm:$0xff]
    %v678 = vld [vmem:[#allocation8 + $0xb8] sm:$0xff]
    %v679 = vld [vmem:[#allocation8 + $0xc0] sm:$0xff]
    %v680 = vld [vmem:[#allocation8 + $0xc8] sm:$0xff]
    %v681 = vld [vmem:[#allocation8 + $0xd0] sm:$0xff]
    %v682 = vld [vmem:[#allocation8 + $0xd8] sm:$0xff]
    %v683 = vld [vmem:[#allocation8 + $0xe0] sm:$0xff]
    %v684 = vld [vmem:[#allocation8 + $0xe8] sm:$0xff]
    %v685 = vld [vmem:[#allocation8 + $0xf0] sm:$0xff]
    %v686 = vld [vmem:[#allocation8 + $0xf8] sm:$0xff]
    %v687 = vld [vmem:[#allocation8 + $0x100] sm:$0xff]
    %v688 = vld [vmem:[#allocation8 + $0x108] sm:$0xff]
    %v689 = vld [vmem:[#allocation8 + $0x110] sm:$0xff]
    %v690 = vld [vmem:[#allocation8 + $0x118] sm:$0xff]
    %v691 = vld [vmem:[#allocation8 + $0x120] sm:$0xff]
    %v692 = vld [vmem:[#allocation8 + $0x128] sm:$0xff]
    %v693 = vld [vmem:[#allocation8 + $0x130] sm:$0xff]
    %v694 = vld [vmem:[#allocation8 + $0x138] sm:$0xff]
    %v695 = vld [vmem:[#allocation8 + $0x140] sm:$0xff]
    %v696 = vld [vmem:[#allocation8 + $0x148] sm:$0xff]
    %v697 = vld [vmem:[#allocation8 + $0x150] sm:$0xff]
    %v698 = vld [vmem:[#allocation8 + $0x158] sm:$0xff]
    %v699 = vld [vmem:[#allocation8 + $0x160] sm:$0xff]
    %v700 = vld [vmem:[#allocation8 + $0x168] sm:$0xff]
    %v701 = vld [vmem:[#allocation8 + $0x170] sm:$0xff]
    %v702 = vld [vmem:[#allocation8 + $0x178] sm:$0xff]
    %v703 = vld [vmem:[#allocation8 + $0x180] sm:$0xff]
    %v704 = vld [vmem:[#allocation8 + $0x188] sm:$0xff]
    %v705 = vld [vmem:[#allocation8 + $0x190] sm:$0xff]
    %v706 = vld [vmem:[#allocation8 + $0x198] sm:$0xff]
    %v707 = vld [vmem:[#allocation8 + $0x1a0] sm:$0xff]
    %v708 = vld [vmem:[#allocation8 + $0x1a8] sm:$0xff]
    %v709 = vld [vmem:[#allocation8 + $0x1b0] sm:$0xff]
    %v710 = vld [vmem:[#allocation8 + $0x1b8] sm:$0xff]
    %s711 = scalar_lea.vmem [#allocation13], 2
    %v712 = vld [vmem:[%s711] ss:$8 sm:$0x3]
    %v714 = vlaneseq
    %v715 = vshrl.u32 %v714, 7
    %v716 = vsub.s32 0, %v715
    %v717 = vrot.slane %v712, %v716
    %v718 = vlaneseq
    %v719 = vshrl.u32 %v718, 7
    %v720 = vsub.s32 1, %v719
    %v721 = vrot.slane %v712, %v720
    %v780 = vunpack.c.l.b16 %v655
    %v781 = vunpack.c.h.b16 %v655
    %v782 = vunpack.c.l.b16 %v656
    %v783 = vunpack.c.h.b16 %v656
    %v784 = vunpack.c.l.b16 %v657
    %v785 = vunpack.c.h.b16 %v657
    %v786 = vunpack.c.l.b16 %v658
    %v787 = vunpack.c.h.b16 %v658
    %v788 = vunpack.c.l.b16 %v659
    %v789 = vunpack.c.h.b16 %v659
    %v790 = vunpack.c.l.b16 %v660
    %v791 = vunpack.c.h.b16 %v660
    %v792 = vunpack.c.l.b16 %v661
    %v793 = vunpack.c.h.b16 %v661
    %v794 = vunpack.c.l.b16 %v662
    %v795 = vunpack.c.h.b16 %v662
    %v796 = vunpack.c.l.b16 %v663
    %v797 = vunpack.c.h.b16 %v663
    %v798 = vunpack.c.l.b16 %v664
    %v799 = vunpack.c.h.b16 %v664
    %v800 = vunpack.c.l.b16 %v665
    %v801 = vunpack.c.h.b16 %v665
    %v802 = vunpack.c.l.b16 %v666
    %v803 = vunpack.c.h.b16 %v666
    %v804 = vunpack.c.l.b16 %v667
    %v805 = vunpack.c.h.b16 %v667
    %v806 = vunpack.c.l.b16 %v668
    %v807 = vunpack.c.h.b16 %v668
    %v808 = vunpack.c.l.b16 %v669
    %v809 = vunpack.c.h.b16 %v669
    %v810 = vunpack.c.l.b16 %v670
    %v811 = vunpack.c.h.b16 %v670
    %v812 = vunpack.c.l.b16 %v671
    %v813 = vunpack.c.h.b16 %v671
    %v814 = vunpack.c.l.b16 %v672
    %v815 = vunpack.c.h.b16 %v672
    %v816 = vunpack.c.l.b16 %v673
    %v817 = vunpack.c.h.b16 %v673
    %v818 = vunpack.c.l.b16 %v674
    %v819 = vunpack.c.h.b16 %v674
    %v820 = vunpack.c.l.b16 %v675
    %v821 = vunpack.c.h.b16 %v675
    %v822 = vunpack.c.l.b16 %v676
    %v823 = vunpack.c.h.b16 %v676
    %v824 = vunpack.c.l.b16 %v677
    %v825 = vunpack.c.h.b16 %v677
    %v826 = vunpack.c.l.b16 %v678
    %v827 = vunpack.c.h.b16 %v678
    %v828 = vunpack.c.l.b16 %v679
    %v829 = vunpack.c.h.b16 %v679
    %v830 = vunpack.c.l.b16 %v680
    %v831 = vunpack.c.h.b16 %v680
    %v832 = vunpack.c.l.b16 %v681
    %v833 = vunpack.c.h.b16 %v681
    %v834 = vunpack.c.l.b16 %v682
    %v835 = vunpack.c.h.b16 %v682
    %v836 = vunpack.c.l.b16 %v683
    %v837 = vunpack.c.h.b16 %v683
    %v838 = vunpack.c.l.b16 %v684
    %v839 = vunpack.c.h.b16 %v684
    %v840 = vunpack.c.l.b16 %v685
    %v841 = vunpack.c.h.b16 %v685
    %v842 = vunpack.c.l.b16 %v686
    %v843 = vunpack.c.h.b16 %v686
    %v844 = vunpack.c.l.b16 %v687
    %v845 = vunpack.c.h.b16 %v687
    %v846 = vunpack.c.l.b16 %v688
    %v847 = vunpack.c.h.b16 %v688
    %v848 = vunpack.c.l.b16 %v689
    %v849 = vunpack.c.h.b16 %v689
    %v850 = vunpack.c.l.b16 %v690
    %v851 = vunpack.c.h.b16 %v690
    %v852 = vunpack.c.l.b16 %v691
    %v853 = vunpack.c.h.b16 %v691
    %v854 = vunpack.c.l.b16 %v692
    %v855 = vunpack.c.h.b16 %v692
    %v856 = vunpack.c.l.b16 %v693
    %v857 = vunpack.c.h.b16 %v693
    %v858 = vunpack.c.l.b16 %v694
    %v859 = vunpack.c.h.b16 %v694
    %v860 = vunpack.c.l.b16 %v695
    %v861 = vunpack.c.h.b16 %v695
    %v862 = vunpack.c.l.b16 %v696
    %v863 = vunpack.c.h.b16 %v696
    %v864 = vunpack.c.l.b16 %v697
    %v865 = vunpack.c.h.b16 %v697
    %v866 = vunpack.c.l.b16 %v698
    %v867 = vunpack.c.h.b16 %v698
    %v868 = vunpack.c.l.b16 %v699
    %v869 = vunpack.c.h.b16 %v699
    %v870 = vunpack.c.l.b16 %v700
    %v871 = vunpack.c.h.b16 %v700
    %v872 = vunpack.c.l.b16 %v701
    %v873 = vunpack.c.h.b16 %v701
    %v874 = vunpack.c.l.b16 %v702
    %v875 = vunpack.c.h.b16 %v702
    %v876 = vunpack.c.l.b16 %v703
    %v877 = vunpack.c.h.b16 %v703
    %v878 = vunpack.c.l.b16 %v704
    %v879 = vunpack.c.h.b16 %v704
    %v880 = vunpack.c.l.b16 %v705
    %v881 = vunpack.c.h.b16 %v705
    %v882 = vunpack.c.l.b16 %v706
    %v883 = vunpack.c.h.b16 %v706
    %v884 = vunpack.c.l.b16 %v707
    %v885 = vunpack.c.h.b16 %v707
    %v886 = vunpack.c.l.b16 %v708
    %v887 = vunpack.c.h.b16 %v708
    %v888 = vunpack.c.l.b16 %v709
    %v889 = vunpack.c.h.b16 %v709
    %v890 = vunpack.c.l.b16 %v710
    %v891 = vunpack.c.h.b16 %v710
    %v892 = vpack.c.b16 %v782, %v780
    %v893 = vpack.c.b16 %v783, %v781
    %v894 = vpack.c.b16 %v786, %v784
    %v895 = vpack.c.b16 %v787, %v785
    %v896 = vpack.c.b16 %v790, %v788
    %v897 = vpack.c.b16 %v791, %v789
    %v898 = vpack.c.b16 %v794, %v792
    %v899 = vpack.c.b16 %v795, %v793
    %v900 = vpack.c.b16 %v798, %v796
    %v901 = vpack.c.b16 %v799, %v797
    %v902 = vpack.c.b16 %v802, %v800
    %v903 = vpack.c.b16 %v803, %v801
    %v904 = vpack.c.b16 %v806, %v804
    %v905 = vpack.c.b16 %v807, %v805
    %v906 = vpack.c.b16 %v810, %v808
    %v907 = vpack.c.b16 %v811, %v809
    %v908 = vpack.c.b16 %v814, %v812
    %v909 = vpack.c.b16 %v815, %v813
    %v910 = vpack.c.b16 %v818, %v816
    %v911 = vpack.c.b16 %v819, %v817
    %v912 = vpack.c.b16 %v822, %v820
    %v913 = vpack.c.b16 %v823, %v821
    %v914 = vpack.c.b16 %v826, %v824
    %v915 = vpack.c.b16 %v827, %v825
    %v916 = vpack.c.b16 %v830, %v828
    %v917 = vpack.c.b16 %v831, %v829
    %v918 = vpack.c.b16 %v834, %v832
    %v919 = vpack.c.b16 %v835, %v833
    %v920 = vpack.c.b16 %v838, %v836
    %v921 = vpack.c.b16 %v839, %v837
    %v922 = vpack.c.b16 %v842, %v840
    %v923 = vpack.c.b16 %v843, %v841
    %v924 = vpack.c.b16 %v846, %v844
    %v925 = vpack.c.b16 %v847, %v845
    %v926 = vpack.c.b16 %v850, %v848
    %v927 = vpack.c.b16 %v851, %v849
    %v928 = vpack.c.b16 %v854, %v852
    %v929 = vpack.c.b16 %v855, %v853
    %v930 = vpack.c.b16 %v858, %v856
    %v931 = vpack.c.b16 %v859, %v857
    %v932 = vpack.c.b16 %v862, %v860
    %v933 = vpack.c.b16 %v863, %v861
    %v934 = vpack.c.b16 %v866, %v864
    %v935 = vpack.c.b16 %v867, %v865
    %v936 = vpack.c.b16 %v870, %v868
    %v937 = vpack.c.b16 %v871, %v869
    %v938 = vpack.c.b16 %v874, %v872
    %v939 = vpack.c.b16 %v875, %v873
    %v940 = vpack.c.b16 %v878, %v876
    %v941 = vpack.c.b16 %v879, %v877
    %v942 = vpack.c.b16 %v882, %v880
    %v943 = vpack.c.b16 %v883, %v881
    %v944 = vpack.c.b16 %v886, %v884
    %v945 = vpack.c.b16 %v887, %v885
    %v946 = vpack.c.b16 %v890, %v888
    %v947 = vpack.c.b16 %v891, %v889
    %v1005 = vsel %vm561, %v654, 0
    %1007 = vmatprep.subr.bf16.mxu0 %v893
    %1008 = vmatpush1.bf16.msra.mxu0 %v892
    %1009 = vmatprep.subr.bf16.mxu0 %v895
    %1010 = vmatpush1.bf16.msra.mxu0 %v894
    %1011 = vmatprep.subr.bf16.mxu0 %v897
    %1012 = vmatpush1.bf16.msra.mxu0 %v896
    %1013 = vmatprep.subr.bf16.mxu0 %v899
    %1014 = vmatpush1.bf16.msra.mxu0 %v898
    %1015 = vmatprep.subr.bf16.mxu0 %v901
    %1016 = vmatpush1.bf16.msra.mxu0 %v900
    %1017 = vmatprep.subr.bf16.mxu0 %v903
    %1018 = vmatpush1.bf16.msra.mxu0 %v902
    %1019 = vmatprep.subr.bf16.mxu0 %v905
    %1020 = vmatpush1.bf16.msra.mxu0 %v904
    %1021 = vmatprep.subr.bf16.mxu0 %v907
    %1022 = vmatpush1.bf16.msra.mxu0 %v906
    %1023 = vmatprep.subr.bf16.mxu0 %v909
    %1024 = vmatpush1.bf16.msra.mxu0 %v908
    %1025 = vmatprep.subr.bf16.mxu0 %v911
    %1026 = vmatpush1.bf16.msra.mxu0 %v910
    %1027 = vmatprep.subr.bf16.mxu0 %v913
    %1028 = vmatpush1.bf16.msra.mxu0 %v912
    %1029 = vmatprep.subr.bf16.mxu0 %v915
    %1030 = vmatpush1.bf16.msra.mxu0 %v914
    %1031 = vmatprep.subr.bf16.mxu0 %v917
    %1032 = vmatpush1.bf16.msra.mxu0 %v916
    %1033 = vmatprep.subr.bf16.mxu0 %v919
    %1034 = vmatpush1.bf16.msra.mxu0 %v918
    %1035 = vmatprep.subr.bf16.mxu0 %v921
    %1036 = vmatpush1.bf16.msra.mxu0 %v920
    %1037 = vmatprep.subr.bf16.mxu0 %v923
    %1038 = vmatpush1.bf16.msra.mxu0 %v922
    %1039 = vmatprep.mubr.bf16.mxu0 %v652
    %1040 = vmatmul.mubr.bf16.gmra.mrb[0].mxu0 %v651
    %v1041 = vpop.f32.mrb[0].mxu0
    %v1042 = vadd.f32 %v717, %v1041
    %v1043 = vpop.f32.mrb[0].mxu0
    %v1044 = vadd.f32 %v721, %v1043
    %v1045 = vpop.f32.mrb[0].mxu0
    %v1046 = vpop.f32.mrb[0].mxu0
    %1047 = vdwg.mxu0
    %1048 = vmatprep.subr.bf16.mxu0 %v925
    %1049 = vmatpush1.bf16.msra.mxu0 %v924
    %1050 = vmatprep.subr.bf16.mxu0 %v927
    %1051 = vmatpush1.bf16.msra.mxu0 %v926
    %1052 = vmatprep.subr.bf16.mxu0 %v929
    %1053 = vmatpush1.bf16.msra.mxu0 %v928
    %1054 = vmatprep.subr.bf16.mxu0 %v931
    %1055 = vmatpush1.bf16.msra.mxu0 %v930
    %1056 = vmatprep.subr.bf16.mxu0 %v933
    %1057 = vmatpush1.bf16.msra.mxu0 %v932
    %1058 = vmatprep.subr.bf16.mxu0 %v935
    %1059 = vmatpush1.bf16.msra.mxu0 %v934
    %1060 = vmatprep.subr.bf16.mxu0 %v937
    %1061 = vmatpush1.bf16.msra.mxu0 %v936
    %1062 = vmatprep.subr.bf16.mxu0 %v939
    %1063 = vmatpush1.bf16.msra.mxu0 %v938
    %1064 = vmatprep.subr.bf16.mxu0 %v941
    %1065 = vmatpush1.bf16.msra.mxu0 %v940
    %1066 = vmatprep.subr.bf16.mxu0 %v943
    %1067 = vmatpush1.bf16.msra.mxu0 %v942
    %1068 = vmatprep.subr.bf16.mxu0 %v945
    %1069 = vmatpush1.bf16.msra.mxu0 %v944
    %1070 = vmatprep.subr.bf16.mxu0 %v947
    %1071 = vmatpush1.bf16.msra.mxu0 %v946
    %1072 = vmatprep.subr.bf16.mxu0 0
    %1073 = vmatpush1.bf16.msra.mxu0 0
    %1074 = vmatprep.subr.bf16.mxu0 0
    %1075 = vmatpush1.bf16.msra.mxu0 0
    %1076 = vmatprep.subr.bf16.mxu0 0
    %1077 = vmatpush1.bf16.msra.mxu0 0
    %1078 = vmatprep.subr.bf16.mxu0 0
    %1079 = vmatpush1.bf16.msra.mxu0 0
    %1080 = vmatprep.mubr.bf16.mxu0 %v1005
    %1081 = vmatmul.mubr.bf16.gmra.mrb[0].mxu0 %v653
    %v1082 = vpop.f32.mrb[0].mxu0
    %v1083 = vadd.f32 %v1042, %v1082
    %v1084 = vpop.f32.mrb[0].mxu0
    %v1085 = vadd.f32 %v1044, %v1084
    %v1086 = vpop.f32.mrb[0].mxu0
    %v1087 = vpop.f32.mrb[0].mxu0
    %1088 = vdwg.mxu0
    %v1089 = vmax.f32 %v1083, 0.0
    %v1090 = vmax.f32 %v1085, 0.0
    %v1091 = vpack.c.bf16 %v1089, %v1089
    %v1092 = vpack.c.bf16 %v1090, %v1090
    %v1093 = vld [vmem:[#allocation10] sm:$0xf]
    %v1094 = vld [vmem:[#allocation10 + $0x4] sm:$0xf]
    %v1095 = vld [vmem:[#allocation10 + $0x8] sm:$0xf]
    %v1096 = vld [vmem:[#allocation10 + $0xc] sm:$0xf]
    %v1097 = vld [vmem:[#allocation10 + $0x10] sm:$0xf]
    %v1098 = vld [vmem:[#allocation10 + $0x14] sm:$0xf]
    %v1099 = vld [vmem:[#allocation10 + $0x18] sm:$0xf]
    %v1100 = vld [vmem:[#allocation10 + $0x1c] sm:$0xf]
    %v1101 = vld [vmem:[#allocation10 + $0x20] sm:$0xf]
    %v1102 = vld [vmem:[#allocation10 + $0x24] sm:$0xf]
    %v1103 = vld [vmem:[#allocation10 + $0x28] sm:$0xf]
    %v1104 = vld [vmem:[#allocation10 + $0x2c] sm:$0xf]
    %v1105 = vld [vmem:[#allocation10 + $0x30] sm:$0xf]
    %v1106 = vld [vmem:[#allocation10 + $0x34] sm:$0xf]
    %v1107 = vld [vmem:[#allocation10 + $0x38] sm:$0xf]
    %v1108 = vld [vmem:[#allocation10 + $0x3c] sm:$0xf]
    %v1109 = vld [vmem:[#allocation10 + $0x40] sm:$0xf]
    %v1110 = vld [vmem:[#allocation10 + $0x44] sm:$0xf]
    %v1111 = vld [vmem:[#allocation10 + $0x48] sm:$0xf]
    %v1112 = vld [vmem:[#allocation10 + $0x4c] sm:$0xf]
    %v1113 = vld [vmem:[#allocation10 + $0x50] sm:$0xf]
    %v1114 = vld [vmem:[#allocation10 + $0x54] sm:$0xf]
    %v1115 = vld [vmem:[#allocation10 + $0x58] sm:$0xf]
    %v1116 = vld [vmem:[#allocation10 + $0x5c] sm:$0xf]
    %v1117 = vld [vmem:[#allocation10 + $0x60] sm:$0xf]
    %v1118 = vld [vmem:[#allocation10 + $0x64] sm:$0xf]
    %v1119 = vld [vmem:[#allocation10 + $0x68] sm:$0xf]
    %v1120 = vld [vmem:[#allocation10 + $0x6c] sm:$0xf]
    %v1121 = vld [vmem:[#allocation10 + $0x70] sm:$0xf]
    %v1122 = vld [vmem:[#allocation10 + $0x74] sm:$0xf]
    %v1123 = vld [vmem:[#allocation10 + $0x78] sm:$0xf]
    %v1124 = vld [vmem:[#allocation10 + $0x7c] sm:$0xf]
    %v1125 = vld [vmem:[#allocation13 + $0x3] ss:$0 sm:$0xff]
    %v1158 = vunpack.c.l.b16 %v1093
    %v1159 = vunpack.c.l.b16 %v1094
    %v1160 = vunpack.c.l.b16 %v1095
    %v1161 = vunpack.c.l.b16 %v1096
    %v1162 = vunpack.c.l.b16 %v1097
    %v1163 = vunpack.c.l.b16 %v1098
    %v1164 = vunpack.c.l.b16 %v1099
    %v1165 = vunpack.c.l.b16 %v1100
    %v1166 = vunpack.c.l.b16 %v1101
    %v1167 = vunpack.c.l.b16 %v1102
    %v1168 = vunpack.c.l.b16 %v1103
    %v1169 = vunpack.c.l.b16 %v1104
    %v1170 = vunpack.c.l.b16 %v1105
    %v1171 = vunpack.c.l.b16 %v1106
    %v1172 = vunpack.c.l.b16 %v1107
    %v1173 = vunpack.c.l.b16 %v1108
    %v1174 = vunpack.c.l.b16 %v1109
    %v1175 = vunpack.c.l.b16 %v1110
    %v1176 = vunpack.c.l.b16 %v1111
    %v1177 = vunpack.c.l.b16 %v1112
    %v1178 = vunpack.c.l.b16 %v1113
    %v1179 = vunpack.c.l.b16 %v1114
    %v1180 = vunpack.c.l.b16 %v1115
    %v1181 = vunpack.c.l.b16 %v1116
    %v1182 = vunpack.c.l.b16 %v1117
    %v1183 = vunpack.c.l.b16 %v1118
    %v1184 = vunpack.c.l.b16 %v1119
    %v1185 = vunpack.c.l.b16 %v1120
    %v1186 = vunpack.c.l.b16 %v1121
    %v1187 = vunpack.c.l.b16 %v1122
    %v1188 = vunpack.c.l.b16 %v1123
    %v1189 = vunpack.c.l.b16 %v1124
    %v1190 = vpack.c.b16 %v1159, %v1158
    %v1191 = vpack.c.b16 %v1161, %v1160
    %v1192 = vpack.c.b16 %v1163, %v1162
    %v1193 = vpack.c.b16 %v1165, %v1164
    %v1194 = vpack.c.b16 %v1167, %v1166
    %v1195 = vpack.c.b16 %v1169, %v1168
    %v1196 = vpack.c.b16 %v1171, %v1170
    %v1197 = vpack.c.b16 %v1173, %v1172
    %v1198 = vpack.c.b16 %v1175, %v1174
    %v1199 = vpack.c.b16 %v1177, %v1176
    %v1200 = vpack.c.b16 %v1179, %v1178
    %v1201 = vpack.c.b16 %v1181, %v1180
    %v1202 = vpack.c.b16 %v1183, %v1182
    %v1203 = vpack.c.b16 %v1185, %v1184
    %v1204 = vpack.c.b16 %v1187, %v1186
    %v1205 = vpack.c.b16 %v1189, %v1188
    %1222 = vmatprep.subr.bf16.mxu0 0
    %1223 = vmatpush1.bf16.msra.mxu0 %v1190
    %1224 = vmatprep.subr.bf16.mxu0 0
    %1225 = vmatpush1.bf16.msra.mxu0 %v1191
    %1226 = vmatprep.subr.bf16.mxu0 0
    %1227 = vmatpush1.bf16.msra.mxu0 %v1192
    %1228 = vmatprep.subr.bf16.mxu0 0
    %1229 = vmatpush1.bf16.msra.mxu0 %v1193
    %1230 = vmatprep.subr.bf16.mxu0 0
    %1231 = vmatpush1.bf16.msra.mxu0 %v1194
    %1232 = vmatprep.subr.bf16.mxu0 0
    %1233 = vmatpush1.bf16.msra.mxu0 %v1195
    %1234 = vmatprep.subr.bf16.mxu0 0
    %1235 = vmatpush1.bf16.msra.mxu0 %v1196
    %1236 = vmatprep.subr.bf16.mxu0 0
    %1237 = vmatpush1.bf16.msra.mxu0 %v1197
    %1238 = vmatprep.subr.bf16.mxu0 0
    %1239 = vmatpush1.bf16.msra.mxu0 %v1198
    %1240 = vmatprep.subr.bf16.mxu0 0
    %1241 = vmatpush1.bf16.msra.mxu0 %v1199
    %1242 = vmatprep.subr.bf16.mxu0 0
    %1243 = vmatpush1.bf16.msra.mxu0 %v1200
    %1244 = vmatprep.subr.bf16.mxu0 0
    %1245 = vmatpush1.bf16.msra.mxu0 %v1201
    %1246 = vmatprep.subr.bf16.mxu0 0
    %1247 = vmatpush1.bf16.msra.mxu0 %v1202
    %1248 = vmatprep.subr.bf16.mxu0 0
    %1249 = vmatpush1.bf16.msra.mxu0 %v1203
    %1250 = vmatprep.subr.bf16.mxu0 0
    %1251 = vmatpush1.bf16.msra.mxu0 %v1204
    %1252 = vmatprep.subr.bf16.mxu0 0
    %1253 = vmatpush1.bf16.msra.mxu0 %v1205
    %1254 = vmatprep.mubr.bf16.mxu0 %v1092
    %1255 = vmatmul.mubr.bf16.gmra.mrb[0].mxu0 %v1091
    %v1256 = vpop.f32.mrb[0].mxu0
    %v1257 = vadd.f32 %v1125, %v1256
    %v1258 = vpop.f32.mrb[0].mxu0
    %v1259 = vpop.f32.mrb[0].mxu0
    %v1260 = vpop.f32.mrb[0].mxu0
    %1261 = vdwg.mxu0
    %v1262 = vmax.f32 %v1257, 0.0
    %v1263 = vpack.c.bf16 %v1262, %v1262
    %v1264 = vld [vmem:[#allocation11] sm:$0xf]
    %v1265 = vld [vmem:[#allocation11 + $0x4] sm:$0xf]
    %v1266 = vld [vmem:[#allocation11 + $0x8] sm:$0xf]
    %v1267 = vld [vmem:[#allocation11 + $0xc] sm:$0xf]
    %v1268 = vld [vmem:[#allocation11 + $0x10] sm:$0xf]
    %v1269 = vld [vmem:[#allocation11 + $0x14] sm:$0xf]
    %v1270 = vld [vmem:[#allocation11 + $0x18] sm:$0xf]
    %v1271 = vld [vmem:[#allocation11 + $0x1c] sm:$0xf]
    %v1272 = vld [vmem:[#allocation11 + $0x20] sm:$0xf]
    %v1273 = vld [vmem:[#allocation11 + $0x24] sm:$0xf]
    %v1274 = vld [vmem:[#allocation11 + $0x28] sm:$0xf]
    %v1275 = vld [vmem:[#allocation11 + $0x2c] sm:$0xf]
    %v1276 = vld [vmem:[#allocation11 + $0x30] sm:$0xf]
    %v1277 = vld [vmem:[#allocation11 + $0x34] sm:$0xf]
    %v1278 = vld [vmem:[#allocation11 + $0x38] sm:$0xf]
    %v1279 = vld [vmem:[#allocation11 + $0x3c] sm:$0xf]
    %v1280 = vld [vmem:[#allocation13 + $0x4] ss:$0 sm:$0xff]
    %v1297 = vunpack.c.l.b16 %v1264
    %v1298 = vunpack.c.l.b16 %v1265
    %v1299 = vunpack.c.l.b16 %v1266
    %v1300 = vunpack.c.l.b16 %v1267
    %v1301 = vunpack.c.l.b16 %v1268
    %v1302 = vunpack.c.l.b16 %v1269
    %v1303 = vunpack.c.l.b16 %v1270
    %v1304 = vunpack.c.l.b16 %v1271
    %v1305 = vunpack.c.l.b16 %v1272
    %v1306 = vunpack.c.l.b16 %v1273
    %v1307 = vunpack.c.l.b16 %v1274
    %v1308 = vunpack.c.l.b16 %v1275
    %v1309 = vunpack.c.l.b16 %v1276
    %v1310 = vunpack.c.l.b16 %v1277
    %v1311 = vunpack.c.l.b16 %v1278
    %v1312 = vunpack.c.l.b16 %v1279
    %v1313 = vpack.c.b16 %v1298, %v1297
    %v1314 = vpack.c.b16 %v1300, %v1299
    %v1315 = vpack.c.b16 %v1302, %v1301
    %v1316 = vpack.c.b16 %v1304, %v1303
    %v1317 = vpack.c.b16 %v1306, %v1305
    %v1318 = vpack.c.b16 %v1308, %v1307
    %v1319 = vpack.c.b16 %v1310, %v1309
    %v1320 = vpack.c.b16 %v1312, %v1311
    %1329 = vmatprep.subr.bf16.mxu0 0
    %1330 = vmatpush1.bf16.msra.mxu0 %v1313
    %1331 = vmatprep.subr.bf16.mxu0 0
    %1332 = vmatpush1.bf16.msra.mxu0 %v1314
    %1333 = vmatprep.subr.bf16.mxu0 0
    %1334 = vmatpush1.bf16.msra.mxu0 %v1315
    %1335 = vmatprep.subr.bf16.mxu0 0
    %1336 = vmatpush1.bf16.msra.mxu0 %v1316
    %1337 = vmatprep.subr.bf16.mxu0 0
    %1338 = vmatpush1.bf16.msra.mxu0 %v1317
    %1339 = vmatprep.subr.bf16.mxu0 0
    %1340 = vmatpush1.bf16.msra.mxu0 %v1318
    %1341 = vmatprep.subr.bf16.mxu0 0
    %1342 = vmatpush1.bf16.msra.mxu0 %v1319
    %1343 = vmatprep.subr.bf16.mxu0 0
    %1344 = vmatpush1.bf16.msra.mxu0 %v1320
    %1345 = vmatprep.subr.bf16.mxu0 0
    %1346 = vmatpush1.bf16.msra.mxu0 0
    %1347 = vmatprep.subr.bf16.mxu0 0
    %1348 = vmatpush1.bf16.msra.mxu0 0
    %1349 = vmatprep.subr.bf16.mxu0 0
    %1350 = vmatpush1.bf16.msra.mxu0 0
    %1351 = vmatprep.subr.bf16.mxu0 0
    %1352 = vmatpush1.bf16.msra.mxu0 0
    %1353 = vmatprep.subr.bf16.mxu0 0
    %1354 = vmatpush1.bf16.msra.mxu0 0
    %1355 = vmatprep.subr.bf16.mxu0 0
    %1356 = vmatpush1.bf16.msra.mxu0 0
    %1357 = vmatprep.subr.bf16.mxu0 0
    %1358 = vmatpush1.bf16.msra.mxu0 0
    %1359 = vmatprep.subr.bf16.mxu0 0
    %1360 = vmatpush1.bf16.msra.mxu0 0
    %1361 = vmatprep.mubr.bf16.mxu0 0
    %1362 = vmatmul.mubr.bf16.gmra.mrb[0].mxu0 %v1263
    %v1363 = vpop.f32.mrb[0].mxu0
    %v1364 = vadd.f32 %v1280, %v1363
    %v1365 = vpop.f32.mrb[0].mxu0
    %v1366 = vpop.f32.mrb[0].mxu0
    %v1367 = vpop.f32.mrb[0].mxu0
    %1368 = vdwg.mxu0
    %1369 = vst [vmem:[#allocation14] sm:$0x3] %v1364
    // Predicated region
    $region58: #{tpu_custom_call.1} parent=1 // pred_check
      _
    $region59: #{tpu_custom_call.1} parent=1 // pred_check_branch
      %1371 = sbr.rel (0) target = $region61
    $region60: #{tpu_custom_call.1} parent=1 // pred_region
      %s1373 = ssub.s32 32, 32
      %1374 = vsyncadd [#allocation4], %s1373
      %s1376 = sshll.u32 [#allocation14], 4
      %s1377 = int_to_ptr.vmem [resolvable:$true] %s1376
      %1379 = dma.vmem_to_hbm [thread:$0]  %s1377, 32, %s7, [#allocation4]
    $region61: #{tpu_custom_call.1} parent=1 // pred_fallthru
      _
    // Predicated region
    $region62: #{tpu_custom_call.1} parent=1 // pred_check
      _
    $region63: #{tpu_custom_call.1} parent=1 // pred_check_branch
      %1381 = sbr.rel (0) target = $region65
    $region64: #{tpu_custom_call.1} parent=1 // pred_region
      %1382 = dma.done [#allocation4], 32
    $region65: #{tpu_custom_call.1} parent=1 // pred_fallthru
      _
    %1383 = vsyncpa [#allocation3], 1
    %1384 = vsyncpa [#allocation6], 1
    %1385 = vsyncpa [#allocation9], 1
    %1386 = vsyncpa [#allocation12], 1
    %1387 = vsyncpa [#allocation4], 1

</llo_original>
